<compile_context>
chip_gen: v6e
topology: v6e:2x2x1
jax: 0.10.0
libtpu: 0.0.40
codegen_flags: <defaults>
</compile_context>

<pallas_src>
import functools

import jax
import jax.numpy as jnp
from jax import lax
from jax.experimental import pallas as pl
from jax.experimental.pallas import tpu as pltpu


def _round_up(x, m):
    return ((x + m - 1) // m) * m


def _softmax_stats_kernel(x_ref, p_ref, logp_ref, nent_ref, *, num_classes):
    """Row-tiled softmax statistics: p, log p (PyTorch nan_to_num parity), NEnt."""
    x = x_ref[...].astype(jnp.float32)                         # (TB, C_pad)
    neg_inf = jnp.float32(-jnp.inf)
    valid = lax.broadcasted_iota(jnp.int32, x.shape, 1) < num_classes

    x_max = jnp.max(jnp.where(valid, x, neg_inf), axis=1, keepdims=True)
    shifted = x - x_max
    e = jnp.exp(jnp.where(valid, shifted, neg_inf))            # padded classes -> 0
    denom = jnp.sum(e, axis=1, keepdims=True)                  # (TB, 1)

    inv = pl.reciprocal(denom)                                 # B reciprocals, not B*C divides
    p = e * inv                                                # VPU multiply

    # log-softmax instead of log(p): one log per row instead of per element.
    # PyTorch parity: where p underflowed to 0, torch gives nan_to_num(-inf) = finfo.min.
    logsm = shifted - jnp.log(denom)
    fmin = jnp.float32(jnp.finfo(jnp.float32).min)
    logp = jnp.where(valid, jnp.where(p > 0.0, logsm, fmin), 0.0)

    nent = jnp.sum(p * logp, axis=1, keepdims=True)            # (TB, 1)

    p_ref[...] = p
    logp_ref[...] = logp
    nent_ref[...] = nent


def _pairwise_kernel(p_ref, logp_ref, nent_ref, labc_ref, labr_ref,
                     out_ref, ce_acc, *, batch):
    """Tiled masked pairwise-KL accumulation.  Grid = (row tiles, col tiles, class chunks)."""
    i = pl.program_id(0)
    j = pl.program_id(1)
    k = pl.program_id(2)
    nk = pl.num_programs(2)

    @pl.when(jnp.logical_and(j == 0, k == 0))
    def _():
        out_ref[...] = jnp.zeros_like(out_ref)

    @pl.when(k == 0)
    def _():
        ce_acc[...] = jnp.zeros_like(ce_acc)

    # CE tile: contract the class dim of p_i (TB, TK) with logp_j (TB, TK) on the MXU.
    ce_acc[...] += lax.dot_general(
        p_ref[...], logp_ref[...], (((1,), (1,)), ((), ())),
        preferred_element_type=jnp.float32)

    @pl.when(k == nk - 1)
    def _():
        tm = labc_ref.shape[0]
        tn = labr_ref.shape[1]
        # In-bounds mask for padded rows/cols (no label-sentinel assumptions).
        row_ids = i * tm + lax.broadcasted_iota(jnp.int32, (tm, tn), 0)
        col_ids = j * tn + lax.broadcasted_iota(jnp.int32, (tm, tn), 1)
        in_bounds = jnp.logical_and(row_ids < batch, col_ids < batch)
        diff = labc_ref[...] != labr_ref[...]
        mask = jnp.logical_and(diff, in_bounds).astype(jnp.float32)   # (TM, TN)

        # Folded mask: sum(mask*(nent - ce)) = sum_i nent_i*negcnt_i - sum(mask*ce).
        neg_cnt = jnp.sum(mask, axis=1, keepdims=True)                # (TM, 1)
        partial = (jnp.sum(nent_ref[...] * neg_cnt)
                   - jnp.sum(mask * ce_acc[...]))
        out_ref[...] = out_ref[...] + partial


def pairwise_kl_loss(output, labels, *, tile_b=256, tile_c=512):
    """output: (B, C) float logits; labels: (B,) integer class ids -> scalar loss."""
    B, C = output.shape

    # Tile sizes: lane-dense (multiples of 128 on the class axis, >=8 sublanes on
    # the batch axis), capped to the (padded) problem size so tiny problems stay tiny.
    tb = min(tile_b, _round_up(B, 8))
    tk = min(tile_c, _round_up(C, 128))
    B_pad = _round_up(B, tb)
    C_pad = _round_up(C, tk)

    # Pad in native dtype (no wrapper-side f32 cast); padded entries are masked
    # out inside the kernels.
    x = jnp.pad(output, ((0, B_pad - B), (0, C_pad - C)))
    lab = jnp.pad(labels.astype(jnp.int32), (0, B_pad - B))
    lab_col = lab.reshape(B_pad, 1)
    lab_row = lab.reshape(1, B_pad)

    n_b = B_pad // tb
    n_k = C_pad // tk

    # ---- pass 1: per-row softmax stats (p, logp, NEnt), row-tiled ----
    # TODO(synk): for very large class counts, add a class-axis grid with an
    # online max/sum instead of loading the full (tb, C_pad) row tile.
    p, logp, nent = pl.pallas_call(
        functools.partial(_softmax_stats_kernel, num_classes=C),
        out_shape=(
            jax.ShapeDtypeStruct((B_pad, C_pad), jnp.float32),
            jax.ShapeDtypeStruct((B_pad, C_pad), jnp.float32),
            jax.ShapeDtypeStruct((B_pad, 1), jnp.float32),
        ),
        grid=(n_b,),
        in_specs=[pl.BlockSpec((tb, C_pad), lambda r: (r, 0))],
        out_specs=(
            pl.BlockSpec((tb, C_pad), lambda r: (r, 0)),
            pl.BlockSpec((tb, C_pad), lambda r: (r, 0)),
            pl.BlockSpec((tb, 1), lambda r: (r, 0)),
        ),
        compiler_params=pltpu.CompilerParams(dimension_semantics=("parallel",)),
    )(x)

    # ---- pass 2: tiled masked pairwise accumulation (flash-style) ----
    partials = pl.pallas_call(
        functools.partial(_pairwise_kernel, batch=B),
        out_shape=jax.ShapeDtypeStruct((n_b, 1), jnp.float32),
        grid=(n_b, n_b, n_k),
        in_specs=[
            pl.BlockSpec((tb, tk), lambda i, j, k: (i, k)),   # p row tile
            pl.BlockSpec((tb, tk), lambda i, j, k: (j, k)),   # logp "column" tile
            pl.BlockSpec((tb, 1), lambda i, j, k: (i, 0)),    # NEnt for row tile
            pl.BlockSpec((tb, 1), lambda i, j, k: (i, 0)),    # labels (rows of pair matrix)
            pl.BlockSpec((1, tb), lambda i, j, k: (0, j)),    # labels (cols of pair matrix)
        ],
        out_specs=pl.BlockSpec((1, 1), lambda i, j, k: (i, 0)),
        scratch_shapes=[pltpu.VMEM((tb, tb), jnp.float32)],
        compiler_params=pltpu.CompilerParams(
            dimension_semantics=("parallel", "arbitrary", "arbitrary")),
    )(p, logp, nent, lab_col, lab_row)

    # Per-row-tile partials -> mean over the original B*B pairs.
    return jnp.sum(partials) / jnp.float32(B * B)


def _reference_loss(output, labels):
    """Pure-JAX reference mirroring the PyTorch forward."""
    p = jax.nn.softmax(output.astype(jnp.float32), axis=1)
    logp = jnp.nan_to_num(jnp.log(p), nan=0.0)
    nent = jnp.sum(p * logp, axis=1, keepdims=True)
    ce = p @ logp.T
    kl = nent - ce
    mask_neg = (labels[:, None] != labels[None, :]).astype(jnp.float32)
    return jnp.mean(mask_neg * kl)


if __name__ == "__main__":
    key = jax.random.PRNGKey(0)
    k_logits, k_labels = jax.random.split(key)

    B, C = 8, 32  # batch of 8 samples, 32 classes
    output = jax.random.normal(k_logits, (B, C), dtype=jnp.float32)
    labels = jax.random.randint(k_labels, (B,), 0, 4, dtype=jnp.int32)

    loss = pairwise_kl_loss(output, labels)
    loss = jax.block_until_ready(loss)

    ref = _reference_loss(output, labels)
    assert jnp.allclose(loss, ref, atol=1e-5, rtol=1e-4), (loss, ref)

    print("KERNEL_OK")
</pallas_src>

<mosaic_0001>
module attributes {stable_mosaic.version = 11 : i64} {
  func.func @_softmax_stats_kernel(%arg0: i32, %arg1: memref<8x128xf32, #tpu.memory_space<vmem>>, %arg2: memref<8x128xf32, #tpu.memory_space<vmem>>, %arg3: memref<8x128xf32, #tpu.memory_space<vmem>>, %arg4: memref<8x1xf32, #tpu.memory_space<vmem>>) attributes {dimension_semantics = [#tpu.dimension_semantics<parallel>], iteration_bounds = array<i64: 1>, scalar_prefetch = 0 : i64, scratch_operands = 0 : i64, tpu.core_type = #tpu.core_type<tc>, window_params = [{transform_indices = @transform_0, window_bounds = array<i64: 8, 128>}, {transform_indices = @transform_1, window_bounds = array<i64: 8, 128>}, {transform_indices = @transform_2, window_bounds = array<i64: 8, 128>}, {transform_indices = @transform_3, window_bounds = array<i64: 8, 1>}]} {
    %c0 = arith.constant 0 : index
    %c0_0 = arith.constant 0 : index
    %0 = vector.load %arg1[%c0, %c0_0] : memref<8x128xf32, #tpu.memory_space<vmem>>, vector<8x128xf32>
    %1 = tpu.iota {dimensions = array<i32: 1>} : vector<8x128xi32>
    %c32_i32 = arith.constant 32 : i32
    %2 = vector.broadcast %c32_i32 : i32 to vector<8x128xi32>
    %3 = arith.cmpi slt, %1, %2 : vector<8x128xi32>
    %cst = arith.constant 0xFF800000 : f32
    %4 = vector.broadcast %cst : f32 to vector<8x128xf32>
    %5 = arith.select %3, %0, %4 : vector<8x128xi1>, vector<8x128xf32>
    %cst_1 = arith.constant dense<0xFF800000> : vector<8xf32>
    %6 = vector.multi_reduction <maximumf>, %5, %cst_1 [1] : vector<8x128xf32> to vector<8xf32>
    %7 = vector.shape_cast %6 : vector<8xf32> to vector<8x1xf32>
    %8 = vector.broadcast %7 : vector<8x1xf32> to vector<8x128xf32>
    %9 = arith.subf %0, %8 : vector<8x128xf32>
    %cst_2 = arith.constant 0xFF800000 : f32
    %10 = vector.broadcast %cst_2 : f32 to vector<8x128xf32>
    %11 = arith.select %3, %9, %10 : vector<8x128xi1>, vector<8x128xf32>
    %12 = math.exp %11 : vector<8x128xf32>
    %cst_3 = arith.constant dense<0.000000e+00> : vector<8xf32>
    %13 = vector.multi_reduction <add>, %12, %cst_3 [1] : vector<8x128xf32> to vector<8xf32>
    %14 = vector.shape_cast %13 : vector<8xf32> to vector<8x1xf32>
    %15 = tpu.reciprocal %14 : vector<8x1xf32> -> vector<8x1xf32>
    %16 = vector.broadcast %15 : vector<8x1xf32> to vector<8x128xf32>
    %17 = arith.mulf %12, %16 : vector<8x128xf32>
    %18 = math.log %14 : vector<8x1xf32>
    %19 = vector.broadcast %18 : vector<8x1xf32> to vector<8x128xf32>
    %20 = arith.subf %9, %19 : vector<8x128xf32>
    %cst_4 = arith.constant 0.000000e+00 : f32
    %21 = vector.broadcast %cst_4 : f32 to vector<8x128xf32>
    %22 = arith.cmpf ogt, %17, %21 : vector<8x128xf32>
    %cst_5 = arith.constant -3.40282347E+38 : f32
    %23 = vector.broadcast %cst_5 : f32 to vector<8x128xf32>
    %24 = arith.select %22, %20, %23 : vector<8x128xi1>, vector<8x128xf32>
    %cst_6 = arith.constant 0.000000e+00 : f32
    %25 = vector.broadcast %cst_6 : f32 to vector<8x128xf32>
    %26 = arith.select %3, %24, %25 : vector<8x128xi1>, vector<8x128xf32>
    %27 = arith.mulf %17, %26 : vector<8x128xf32>
    %cst_7 = arith.constant dense<0.000000e+00> : vector<8xf32>
    %28 = vector.multi_reduction <add>, %27, %cst_7 [1] : vector<8x128xf32> to vector<8xf32>
    %29 = vector.shape_cast %28 : vector<8xf32> to vector<8x1xf32>
    %c0_8 = arith.constant 0 : index
    %c0_9 = arith.constant 0 : index
    %30 = vector.load %arg2[%c0_8, %c0_9] : memref<8x128xf32, #tpu.memory_space<vmem>>, vector<8x128xf32>
    tpu.vector_store %arg2[%c0_8, %c0_9], %17 {strides = array<i32>} : memref<8x128xf32, #tpu.memory_space<vmem>>, vector<8x128xf32>,
    %c0_10 = arith.constant 0 : index
    %c0_11 = arith.constant 0 : index
    %31 = vector.load %arg3[%c0_10, %c0_11] : memref<8x128xf32, #tpu.memory_space<vmem>>, vector<8x128xf32>
    tpu.vector_store %arg3[%c0_10, %c0_11], %26 {strides = array<i32>} : memref<8x128xf32, #tpu.memory_space<vmem>>, vector<8x128xf32>,
    %c0_12 = arith.constant 0 : index
    %c0_13 = arith.constant 0 : index
    %32 = vector.load %arg4[%c0_12, %c0_13] : memref<8x1xf32, #tpu.memory_space<vmem>>, vector<8x1xf32>
    tpu.vector_store %arg4[%c0_12, %c0_13], %29 {strides = array<i32>} : memref<8x1xf32, #tpu.memory_space<vmem>>, vector<8x1xf32>,
    return
  }
  func.func @transform_0(%arg0: i32) -> (i32, i32) {
    %c0_i32 = arith.constant 0 : i32
    %c0_i32_0 = arith.constant 0 : i32
    return %arg0, %c0_i32 : i32, i32
  }
  func.func @transform_1(%arg0: i32) -> (i32, i32) {
    %c0_i32 = arith.constant 0 : i32
    %c0_i32_0 = arith.constant 0 : i32
    return %arg0, %c0_i32 : i32, i32
  }
  func.func @transform_2(%arg0: i32) -> (i32, i32) {
    %c0_i32 = arith.constant 0 : i32
    %c0_i32_0 = arith.constant 0 : i32
    return %arg0, %c0_i32 : i32, i32
  }
  func.func @transform_3(%arg0: i32) -> (i32, i32) {
    %c0_i32 = arith.constant 0 : i32
    %c0_i32_0 = arith.constant 0 : i32
    return %arg0, %c0_i32 : i32, i32
  }
}

</mosaic_0001>

<llo_original>
// kernel: tpu_custom_call.1
$region0: #{tpu_custom_call.1}
  #allocation0 [shape = 'u32[]', space=smem, size = 0x4, offset = 0x4, fixed_abs, tag = 'smem constant byte address 0x4 - core index']
  #allocation1 [shape = 'u32[144,128]{1,0:T(1,128)}', space=vmem, size = 0x12000, scoped, tag = 'internal scratch']
  %s0 = inlined_call_operand.hbm [shape: f32[8,128], index: 0, kind: input, shape index: {}]
  %s1 = inlined_call_operand.hbm [shape: f32[8,128], index: 1, kind: output, shape index: {0}]
  %s2 = inlined_call_operand.hbm [shape: f32[8,128], index: 2, kind: output, shape index: {1}]
  %s3 = inlined_call_operand.vmem [shape: f32[8,1], index: 3, kind: output, shape index: {2}]
  %4 = xla_tuple %s1, %s2, %s3
  %s5 = sld [smem:[#allocation0]]
  $region34: #{tpu_custom_call.1} parent=0
    _
  %s7 = ssub.s32 1, %s5
  %s8 = scalar_select 0, %s7, %s5
  $region1: #{tpu_custom_call.1} parent=0
    #allocation2 [shape = 'u8[4096]{0}', space=vmem, size = 0x1000, scoped, tag = 'input window, operand 0, single buffered']
    #allocation3 [shape = 's32[1]{0}', space=sflag, size = 0x4, scoped, tag = 'scoped memory for tpu_custom_call.1']
    #allocation4 [shape = 's32[1]{0}', space=sflag, size = 0x4, scoped, tag = 'scoped memory for tpu_custom_call.1']
    #allocation5 [shape = 'u8[4096]{0}', space=vmem, size = 0x1000, scoped, tag = 'output window, operand 0, single buffered']
    #allocation6 [shape = 'u8[4096]{0}', space=vmem, size = 0x1000, scoped, tag = 'output window, operand 1, single buffered']
    #allocation7 [shape = 's32[1]{0}', space=sflag, size = 0x4, scoped, tag = 'scoped memory for tpu_custom_call.1']
    %9 = vsyncpa [#allocation3], 0
    %10 = vsyncpa [#allocation4], 0
    %11 = vsyncpa [#allocation7], 0
    // Predicated region
    $region2: #{tpu_custom_call.1} parent=1 // pred_check
      _
    $region3: #{tpu_custom_call.1} parent=1 // pred_check_branch
      %13 = sbr.rel (0) target = $region5
    $region4: #{tpu_custom_call.1} parent=1 // pred_region
      %s15 = ssub.s32 128, 128
      %16 = vsyncadd [#allocation3], %s15
      %s18 = sshll.u32 [#allocation2], 4
      %s19 = int_to_ptr.vmem [resolvable:$true] %s18
      %21 = dma.hbm_to_vmem [thread:$0]  %s0, 128, %s19, [#allocation3]
    $region5: #{tpu_custom_call.1} parent=1 // pred_fallthru
      _
    // Predicated region
    $region6: #{tpu_custom_call.1} parent=1 // pred_check
      _
    $region7: #{tpu_custom_call.1} parent=1 // pred_check_branch
      %23 = sbr.rel (0) target = $region9
    $region8: #{tpu_custom_call.1} parent=1 // pred_region
      %24 = dma.done [#allocation3], 128
    $region9: #{tpu_custom_call.1} parent=1 // pred_fallthru
      _
    %v25 = vld [vmem:[#allocation2] sm:$0xff]
    %v26 = vlaneseq
    %v27 = vand.u32 %v26, 127
    %vm28 = vcmp.lt.s32.totalorder %v27, 32
    %v29 = vsel %vm28, %v25, -inf
    %30 = vmax.xlane.f32.xlu0 %v29
    %v31 = vpop.xlane.xlu0 %30
    %v32 = vsub.f32 %v25, %v31
    %v33 = vsel %vm28, %v32, -inf
    %v34 = vmul.f32 %v33, 1.442695
    %v35 = vpow.pop %v34
    %36 = vadd.xlane.f32.xlu0 %v35
    %v37 = vpop.xlane.xlu0 %36
    %v38 = vrcp.pop %v37
    %v39 = vmul.f32 %v35, %v38
    %v40 = vlog2.pop %v37
    %v41 = vmul.f32 %v40, 0.6931472
    %v42 = vsub.f32 %v32, %v41
    %vm43 = vcmp.gt.f32.partialorder %v39, 0.0
    %v44 = vsel %vm43, %v42, -3.4028235e+38
    %v45 = vsel %vm28, %v44, 0.0
    %v46 = vmul.f32 %v39, %v45
    %47 = vadd.xlane.f32.xlu0 %v46
    %v48 = vpop.xlane.xlu0 %47
    %49 = vst [vmem:[#allocation5] sm:$0xff] %v39
    %50 = vst [vmem:[#allocation6] sm:$0xff] %v45
    %vm51 = vcmask 7168
    %52 = vst.msk [vmem:[%s3] sm:$0xff] %vm51, %v48
    // Predicated region
    $region10: #{tpu_custom_call.1} parent=1 // pred_check
      _
    $region11: #{tpu_custom_call.1} parent=1 // pred_check_branch
      %54 = sbr.rel (0) target = $region13
    $region12: #{tpu_custom_call.1} parent=1 // pred_region
      %s56 = ssub.s32 128, 128
      %57 = vsyncadd [#allocation4], %s56
      %s59 = sshll.u32 [#allocation5], 4
      %s60 = int_to_ptr.vmem [resolvable:$true] %s59
      %62 = dma.vmem_to_hbm [thread:$0]  %s60, 128, %s1, [#allocation4]
    $region13: #{tpu_custom_call.1} parent=1 // pred_fallthru
      _
    // Predicated region
    $region14: #{tpu_custom_call.1} parent=1 // pred_check
      _
    $region15: #{tpu_custom_call.1} parent=1 // pred_check_branch
      %64 = sbr.rel (0) target = $region17
    $region16: #{tpu_custom_call.1} parent=1 // pred_region
      %s66 = ssub.s32 128, 128
      %67 = vsyncadd [#allocation7], %s66
      %s69 = sshll.u32 [#allocation6], 4
      %s70 = int_to_ptr.vmem [resolvable:$true] %s69
      %72 = dma.vmem_to_hbm [thread:$0]  %s70, 128, %s2, [#allocation7]
    $region17: #{tpu_custom_call.1} parent=1 // pred_fallthru
      _
    // Predicated region
    $region18: #{tpu_custom_call.1} parent=1 // pred_check
      _
    $region19: #{tpu_custom_call.1} parent=1 // pred_check_branch
      %74 = sbr.rel (0) target = $region21
    $region20: #{tpu_custom_call.1} parent=1 // pred_region
      _
    $region21: #{tpu_custom_call.1} parent=1 // pred_fallthru
      _
    // Predicated region
    $region22: #{tpu_custom_call.1} parent=1 // pred_check
      _
    $region23: #{tpu_custom_call.1} parent=1 // pred_check_branch
      %76 = sbr.rel (0) target = $region25
    $region24: #{tpu_custom_call.1} parent=1 // pred_region
      %77 = dma.done [#allocation4], 128
    $region25: #{tpu_custom_call.1} parent=1 // pred_fallthru
      _
    // Predicated region
    $region26: #{tpu_custom_call.1} parent=1 // pred_check
      _
    $region27: #{tpu_custom_call.1} parent=1 // pred_check_branch
      %79 = sbr.rel (0) target = $region29
    $region28: #{tpu_custom_call.1} parent=1 // pred_region
      %80 = dma.done [#allocation7], 128
    $region29: #{tpu_custom_call.1} parent=1 // pred_fallthru
      _
    // Predicated region
    $region30: #{tpu_custom_call.1} parent=1 // pred_check
      _
    $region31: #{tpu_custom_call.1} parent=1 // pred_check_branch
      %82 = sbr.rel (0) target = $region33
    $region32: #{tpu_custom_call.1} parent=1 // pred_region
      _
    $region33: #{tpu_custom_call.1} parent=1 // pred_fallthru
      _
    %83 = vsyncpa [#allocation3], 1
    %84 = vsyncpa [#allocation4], 1
    %85 = vsyncpa [#allocation7], 1

</llo_original>
